<compile_context>
chip_gen: v6e
topology: v6e:2x2x1
jax: 0.10.0
libtpu: 0.0.40
codegen_flags: <defaults>
</compile_context>

<pallas_src>
import functools

import jax
import jax.numpy as jnp
from jax import lax
from jax.experimental import pallas as pl
from jax.experimental.pallas import tpu as pltpu


# ----------------------------- Pallas kernels ------------------------------ #

def _fmm_kernel(*refs, pre_relu, has_add):
    """out = (relu?(x) @ w) + shift (+ add); x/w bf16 operands, f32 accumulate."""
    if has_add:
        x_ref, w_ref, shift_ref, add_ref, o_ref = refs
    else:
        x_ref, w_ref, shift_ref, o_ref = refs
        add_ref = None
    x = x_ref[...]
    if pre_relu:
        x = jnp.maximum(x, 0)
    acc = jnp.dot(x, w_ref[...], preferred_element_type=jnp.float32)
    acc = acc + shift_ref[...]
    if add_ref is not None:
        acc = acc + add_ref[...].astype(jnp.float32)
    o_ref[...] = acc.astype(o_ref.dtype)


def _pick_tm(m):
    """Row tile: largest 128..1024 divisor of m, preferring >=2 grid steps."""
    for tm in (1024, 512, 256, 128):
        if m % tm == 0 and m // tm >= 2:
            return tm, m
    for tm in (1024, 512, 256, 128):
        if m % tm == 0:
            return tm, m
    mp = ((m + 127) // 128) * 128      # fallback: pad M (not hit on model path)
    return 128, mp


def fused_matmul(x, w, shift, *, pre_relu=False, add=None, out_dtype=jnp.bfloat16):
    """(relu?(x) @ w) + shift (+ add). BN scale must already be folded into w."""
    m, k = x.shape
    k2, nout = w.shape
    assert k == k2
    tm, mp = _pick_tm(m)

    x = x.astype(jnp.bfloat16)
    w = w.astype(jnp.bfloat16)
    shift2 = jnp.reshape(shift, (1, nout)).astype(jnp.float32)
    if add is not None:
        add = jnp.reshape(add, (m, nout))
    if mp != m:                         # ragged-M fallback path only
        x = jnp.pad(x, ((0, mp - m), (0, 0)))
        if add is not None:
            add = jnp.pad(add, ((0, mp - m), (0, 0)))

    in_specs = [
        pl.BlockSpec((tm, k), lambda i: (i, 0)),
        pl.BlockSpec((k, nout), lambda i: (0, 0)),
        pl.BlockSpec((1, nout), lambda i: (0, 0)),
    ]
    args = [x, w, shift2]
    if add is not None:
        in_specs.append(pl.BlockSpec((tm, nout), lambda i: (i, 0)))
        args.append(add)

    out = pl.pallas_call(
        functools.partial(_fmm_kernel, pre_relu=pre_relu, has_add=add is not None),
        out_shape=jax.ShapeDtypeStruct((mp, nout), out_dtype),
        grid=(mp // tm,),
        in_specs=in_specs,
        out_specs=pl.BlockSpec((tm, nout), lambda i: (i, 0)),
        compiler_params=pltpu.CompilerParams(
            dimension_semantics=("parallel",),
            vmem_limit_bytes=32 * 1024 * 1024),
    )(*args)
    return out[:m] if mp != m else out


def _add_kernel(a_ref, b_ref, o_ref):
    o_ref[...] = a_ref[...] + b_ref[...]


def pallas_add(a, b):
    """Elementwise a + b, flattened to lane-dense (rows, 128) tiles (fallback)."""
    assert a.shape == b.shape
    shape = a.shape
    dt = jnp.result_type(a.dtype, b.dtype)
    n_el = a.size
    n_pad = ((n_el + 1023) // 1024) * 1024
    af = jnp.pad(a.reshape(-1).astype(dt), (0, n_pad - n_el)).reshape(n_pad // 128, 128)
    bf = jnp.pad(b.reshape(-1).astype(dt), (0, n_pad - n_el)).reshape(n_pad // 128, 128)
    rows = n_pad // 128
    tr = min(rows, 512)
    while rows % tr:
        tr //= 2
    out = pl.pallas_call(
        _add_kernel,
        out_shape=jax.ShapeDtypeStruct((rows, 128), dt),
        grid=(rows // tr,),
        in_specs=[pl.BlockSpec((tr, 128), lambda i: (i, 0))] * 2,
        out_specs=pl.BlockSpec((tr, 128), lambda i: (i, 0)),
        compiler_params=pltpu.CompilerParams(dimension_semantics=("parallel",)),
    )(af, bf)
    return out.reshape(-1)[:n_el].reshape(shape)


# ------------------------------ conv wrappers ------------------------------- #

def conv1x1_bn(p, x, *, pre_relu=False, add=None):
    """x NHWC; PyTorch weight (Cout, Cin, 1, 1); eval-mode BN folded into W/shift."""
    n, h, w, cin = x.shape
    cout = p["w"].shape[0]
    xm = x.reshape(n * h * w, cin)
    wm = jnp.transpose(p["w"][:, :, 0, 0], (1, 0)) * p["scale"][None, :]
    out = fused_matmul(xm, wm, p["shift"], pre_relu=pre_relu, add=add)
    return out.reshape(n, h, w, cout)


def _im2col_3x3(x):
    """(N, H, W, Cin) -> (N*H*W, 9*Cin) pad-1 3x3 patches, stored in bf16."""
    n, h, w, cin = x.shape
    xp = jnp.pad(x.astype(jnp.bfloat16), ((0, 0), (1, 1), (1, 1), (0, 0)))
    cols = [xp[:, kh:kh + h, kw:kw + w, :] for kh in range(3) for kw in range(3)]
    return jnp.concatenate(cols, axis=-1).reshape(n * h * w, 9 * cin)


def conv3x3_bn(p, x, *, pre_relu, add=None):
    """stride 1, pad 1; PyTorch weight (Cout, Cin, 3, 3)."""
    n, h, w, cin = x.shape
    cout = p["w"].shape[0]
    if pre_relu:
        x = jnp.maximum(x, 0)          # relu once on NHWC, not 9x on the im2col
    xm = _im2col_3x3(x)
    wm = jnp.transpose(p["w"], (2, 3, 1, 0)).reshape(9 * cin, cout) * p["scale"][None, :]
    out = fused_matmul(xm, wm, p["shift"], add=add)
    return out.reshape(n, h, w, cout)


_PARITIES = ((0, 0), (0, 1), (1, 0), (1, 1))


def _tc_tap(parity, shift):
    """kh (or kw) of the flipped 3x3 kernel that feeds output parity `parity`
    from input shift `shift`; None -> no contribution."""
    if parity == 0:
        return 1 if shift == 0 else None
    return 0 if shift == 0 else 2


def conv_transpose3x3_s2_bn(p, x, *, pre_relu):
    """ConvTranspose2d(k=3, s=2, p=1, output_padding=1) + BN(eval); PyTorch
    weight layout (Cin, Cout, 3, 3). Phase decomposition: one matmul on the
    original (h, w) grid against a (4*Cin, 4*Cout) weight (one Cout block per
    output parity), then depth-to-space interleave -- no zero insertion."""
    n, h, w, cin = x.shape
    cout = p["w"].shape[1]
    if pre_relu:
        x = jnp.maximum(x, 0)
    xp = jnp.pad(x.astype(jnp.bfloat16), ((0, 0), (0, 1), (0, 1), (0, 0)))
    cols = [xp[:, sh:sh + h, sw:sw + w, :] for sh, sw in _PARITIES]
    xm = jnp.concatenate(cols, axis=-1).reshape(n * h * w, 4 * cin)

    # flipped kernel in HWIO: wf[kh, kw, ci, co] = W[ci, co, 2-kh, 2-kw]
    wf = jnp.flip(jnp.transpose(p["w"], (2, 3, 0, 1)), axis=(0, 1))
    zero = jnp.zeros((cin, cout), jnp.float32)
    wrows = []
    for sh, sw in _PARITIES:                 # K blocks (input shifts)
        blocks = []
        for ph, pw in _PARITIES:             # output blocks (output parities)
            kh, kw = _tc_tap(ph, sh), _tc_tap(pw, sw)
            blocks.append(zero if kh is None or kw is None else wf[kh, kw])
        wrows.append(jnp.concatenate(blocks, axis=-1))
    wm = jnp.concatenate(wrows, axis=0) * jnp.tile(p["scale"], 4)[None, :]

    out = fused_matmul(xm, wm, jnp.tile(p["shift"], 4))        # (n*h*w, 4*cout)
    out = out.reshape(n, h, w, 2, 2, cout)                     # (.., ph, pw, c)
    out = jnp.transpose(out, (0, 1, 3, 2, 4, 5)).reshape(n, 2 * h, 2 * w, cout)
    return out


# ------------------------------ node / glue --------------------------------- #

def consistent_dim_nhwc(states):
    """F.interpolate(ss, (h_max, w_max)) with mode='nearest' (PyTorch default)."""
    h_max = max(s.shape[1] for s in states)
    w_max = max(s.shape[2] for s in states)
    outs = []
    for s in states:
        _, h, w, _ = s.shape
        if h == h_max and w == w_max:
            outs.append(s)
        else:
            hi = (jnp.arange(h_max) * h // h_max).astype(jnp.int32)
            wi = (jnp.arange(w_max) * w // w_max).astype(jnp.int32)
            outs.append(s[:, hi][:, :, wi])
    return outs


def _node_op(p, op_id, state, add=None):
    if op_id == 0:                      # Identity
        assert add is None
        return state
    if op_id == 1:                      # ReLU -> Conv3x3 -> BN
        return conv3x3_bn(p, state, pre_relu=True, add=add)
    raise NotImplementedError(f"op {op_id} not in assumed search space")


def node_forward(node_p, x_id, x_op, y_id, y_op, states):
    xs, ys = states[x_id], states[y_id]
    same_hw = xs.shape[1:3] == ys.shape[1:3]
    if same_hw and y_op == 1:           # fuse node-sum into the y-conv epilogue
        first = _node_op(node_p["x"], x_op, xs)
        return _node_op(node_p["y"], y_op, ys, add=first)
    if same_hw and x_op == 1:           # fuse node-sum into the x-conv epilogue
        return _node_op(node_p["x"], x_op, xs, add=ys)
    x = _node_op(node_p["x"], x_op, xs)  # fallback: sizes differ / both identity
    y = _node_op(node_p["y"], y_op, ys)
    x, y = consistent_dim_nhwc([x, y])
    return pallas_add(x, y)


# ------------------------------ parameter init ------------------------------ #

def _bn_params(key, c):
    k1, k2 = jax.random.split(key)
    gamma = 1.0 + 0.1 * jax.random.normal(k1, (c,), jnp.float32)
    beta = 0.1 * jax.random.normal(k2, (c,), jnp.float32)
    eps = 1e-5
    # eval-mode BN with running_mean=0, running_var=1 folded to scale/shift
    return {"scale": gamma / jnp.sqrt(1.0 + eps), "shift": beta}


def init_cell_up_params(key, arch, ch_prev_2, ch_prev, channels):
    keys = iter(jax.random.split(key, 64))
    params = {}
    params["pre0"] = {
        "w": 0.1 * jax.random.normal(next(keys), (channels, ch_prev_2, 1, 1), jnp.float32),
        **_bn_params(next(keys), channels)}
    params["pre1"] = {
        "w": 0.1 * jax.random.normal(next(keys), (channels * 4, ch_prev, 1, 1), jnp.float32),
        **_bn_params(next(keys), channels * 4)}
    params["pre1_"] = {  # ConvTranspose weight layout (Cin, Cout, 3, 3)
        "w": 0.1 * jax.random.normal(next(keys), (channels * 4, channels, 3, 3), jnp.float32),
        **_bn_params(next(keys), channels)}
    node_params = []
    for i in range(len(arch) // 4):
        x_op, y_op = arch[4 * i + 1], arch[4 * i + 3]
        entry = {}
        for name, op in (("x", x_op), ("y", y_op)):
            if op == 1:
                entry[name] = {
                    "w": 0.1 * jax.random.normal(next(keys), (channels, channels, 3, 3), jnp.float32),
                    **_bn_params(next(keys), channels)}
            else:
                entry[name] = None
        node_params.append(entry)
    params["nodes"] = node_params
    return params


# ------------------------------ cellUp forward ------------------------------ #

def cell_up_forward(params, arch, s0_nchw, s1_nchw):
    s0 = jnp.transpose(s0_nchw, (0, 2, 3, 1))          # NCHW -> NHWC
    s1 = jnp.transpose(s1_nchw, (0, 2, 3, 1))

    s0 = conv1x1_bn(params["pre0"], s0)                              # preprocess0
    s1 = conv1x1_bn(params["pre1"], s1)                              # preprocess1
    s1 = conv_transpose3x3_s2_bn(params["pre1_"], s1, pre_relu=True)  # preprocess1_

    states = [s0, s1]
    nodes = len(arch) // 4
    for i in range(nodes):
        x_id, x_op, y_id, y_op = arch[4 * i: 4 * i + 4]
        states.append(node_forward(params["nodes"][i], x_id, x_op, y_id, y_op, states))

    out = jnp.concatenate(states[-nodes:], axis=-1)     # concat over channels
    return jnp.transpose(out, (0, 3, 1, 2)).astype(jnp.float32)   # back to NCHW


# ---------------------------------- main ------------------------------------ #

def _assert_close(got, ref, name, tol=5e-2):
    got = jnp.asarray(got).astype(jnp.float32)
    ref = jnp.asarray(ref).astype(jnp.float32)
    err = float(jnp.max(jnp.abs(got - ref)))
    scale = float(jnp.max(jnp.abs(ref)))
    assert err <= tol * scale + 1e-3, (name, err, scale)


if __name__ == "__main__":
    key = jax.random.PRNGKey(0)
    ks = jax.random.split(key, 16)

    batch, channels = 2, 4
    ch_prev_2, ch_prev = 8, 16
    arch = [0, 1, 1, 0, 2, 1, 1, 1]     # 2 nodes

    s0 = jax.random.normal(ks[0], (batch, ch_prev_2, 16, 16), jnp.float32)
    s1 = jax.random.normal(ks[1], (batch, ch_prev, 8, 8), jnp.float32)
    params = init_cell_up_params(ks[2], arch, ch_prev_2, ch_prev, channels)

    # --- self test 1: fused matmul (ragged-M pad path, pre-relu, fused add) ---
    xt = jax.random.normal(ks[3], (200, 36), jnp.float32)
    wt = jax.random.normal(ks[4], (36, 8), jnp.float32)
    sh = jax.random.normal(ks[5], (8,), jnp.float32)
    ad = jax.random.normal(ks[6], (200, 8), jnp.float32)
    got = fused_matmul(xt, wt, sh, pre_relu=True, add=ad, out_dtype=jnp.float32)
    refx = jnp.maximum(xt, 0).astype(jnp.bfloat16).astype(jnp.float32)
    refw = wt.astype(jnp.bfloat16).astype(jnp.float32)
    ref = jnp.dot(refx, refw, precision=lax.Precision.HIGHEST) + sh + ad
    _assert_close(got, ref, "fused_matmul", tol=1e-2)

    # --- self test 2: conv3x3 + folded BN vs lax reference ---
    xc = jax.random.normal(ks[7], (2, 16, 16, 4), jnp.float32)
    pc = {"w": 0.1 * jax.random.normal(ks[8], (4, 4, 3, 3), jnp.float32),
          "scale": 1.0 + 0.1 * jax.random.normal(ks[9], (4,), jnp.float32),
          "shift": 0.1 * jax.random.normal(ks[10], (4,), jnp.float32)}
    got = conv3x3_bn(pc, xc, pre_relu=True)
    ref = lax.conv_general_dilated(
        jnp.maximum(xc, 0), jnp.transpose(pc["w"], (2, 3, 1, 0)),
        window_strides=(1, 1), padding=((1, 1), (1, 1)),
        dimension_numbers=("NHWC", "HWIO", "NHWC"),
        precision=lax.Precision.HIGHEST) * pc["scale"] + pc["shift"]
    _assert_close(got, ref, "conv3x3_bn")

    # --- self test 3: phase-decomposed ConvTranspose(k3,s2,p1,op1) vs lax ---
    xu = jax.random.normal(ks[11], (2, 8, 8, 16), jnp.float32)
    pu = {"w": 0.1 * jax.random.normal(ks[12], (16, 4, 3, 3), jnp.float32),
          "scale": 1.0 + 0.1 * jax.random.normal(ks[13], (4,), jnp.float32),
          "shift": 0.1 * jax.random.normal(ks[14], (4,), jnp.float32)}
    got = conv_transpose3x3_s2_bn(pu, xu, pre_relu=True)
    wf = jnp.flip(jnp.transpose(pu["w"], (2, 3, 0, 1)), axis=(0, 1))
    ref = lax.conv_general_dilated(
        jnp.maximum(xu, 0), wf, window_strides=(1, 1), padding=((1, 2), (1, 2)),
        lhs_dilation=(2, 2), dimension_numbers=("NHWC", "HWIO", "NHWC"),
        precision=lax.Precision.HIGHEST) * pu["scale"] + pu["shift"]
    _assert_close(got, ref, "conv_transpose3x3_s2_bn")

    # --- self test 4: fallback lane-dense Pallas add ---
    aa = jax.random.normal(ks[15], (2, 5, 7, 3), jnp.float32)
    bb = aa * 0.5 - 1.0
    _assert_close(pallas_add(aa, bb), aa + bb, "pallas_add", tol=1e-6)

    # --- full cellUp forward ---
    fwd = jax.jit(lambda p, a, b: cell_up_forward(p, arch, a, b))
    out = jax.block_until_ready(fwd(params, s0, s1))

    nodes = len(arch) // 4
    expected_shape = (batch, nodes * channels, 16, 16)
    assert out.shape == expected_shape, (out.shape, expected_shape)
    assert bool(jnp.all(jnp.isfinite(out)))
    print("KERNEL_OK")
</pallas_src>

<mosaic_0001>
module attributes {stable_mosaic.version = 11 : i64} {
  func.func @_fmm_kernel(%arg0: i32, %arg1: memref<128x36xbf16, #tpu.memory_space<vmem>>, %arg2: memref<36x8xbf16, #tpu.memory_space<vmem>>, %arg3: memref<1x8xf32, #tpu.memory_space<vmem>>, %arg4: memref<128x8xf32, #tpu.memory_space<vmem>>, %arg5: memref<128x8xf32, #tpu.memory_space<vmem>>) attributes {dimension_semantics = [#tpu.dimension_semantics<parallel>], iteration_bounds = array<i64: 2>, scalar_prefetch = 0 : i64, scratch_operands = 0 : i64, tpu.core_type = #tpu.core_type<tc>, window_params = [{transform_indices = @transform_0, window_bounds = array<i64: 128, 36>}, {pipeline_mode = #tpu.pipeline_mode<synchronous>, transform_indices = @transform_1, window_bounds = array<i64: 36, 8>}, {pipeline_mode = #tpu.pipeline_mode<synchronous>, transform_indices = @transform_2, window_bounds = array<i64: 1, 8>}, {transform_indices = @transform_3, window_bounds = array<i64: 128, 8>}, {transform_indices = @transform_4, window_bounds = array<i64: 128, 8>}]} {
    %c0 = arith.constant 0 : index
    %c0_0 = arith.constant 0 : index
    %0 = vector.load %arg1[%c0, %c0_0] : memref<128x36xbf16, #tpu.memory_space<vmem>>, vector<128x36xbf16>
    %cst = arith.constant 0.000000e+00 : bf16
    %1 = vector.broadcast %cst : bf16 to vector<128x36xbf16>
    %2 = arith.maximumf %0, %1 : vector<128x36xbf16>
    %c0_1 = arith.constant 0 : index
    %c0_2 = arith.constant 0 : index
    %3 = vector.load %arg2[%c0_1, %c0_2] : memref<36x8xbf16, #tpu.memory_space<vmem>>, vector<36x8xbf16>
    %cst_3 = arith.constant dense<0.000000e+00> : vector<128x8xf32>
    %4 = tpu.matmul %2, %3, %cst_3 {dimension_numbers = #tpu.dot_dimension_numbers<[1], [0], [0], [1], [0, 0, 1, 1], [], []>} : vector<128x36xbf16>, vector<36x8xbf16>, vector<128x8xf32> -> vector<128x8xf32>
    %c0_4 = arith.constant 0 : index
    %c0_5 = arith.constant 0 : index
    %5 = vector.load %arg3[%c0_4, %c0_5] : memref<1x8xf32, #tpu.memory_space<vmem>>, vector<1x8xf32>
    %6 = vector.broadcast %5 : vector<1x8xf32> to vector<128x8xf32>
    %7 = arith.addf %4, %6 : vector<128x8xf32>
    %c0_6 = arith.constant 0 : index
    %c0_7 = arith.constant 0 : index
    %8 = vector.load %arg4[%c0_6, %c0_7] : memref<128x8xf32, #tpu.memory_space<vmem>>, vector<128x8xf32>
    %9 = arith.addf %7, %8 : vector<128x8xf32>
    %c0_8 = arith.constant 0 : index
    %c0_9 = arith.constant 0 : index
    %10 = vector.load %arg5[%c0_8, %c0_9] : memref<128x8xf32, #tpu.memory_space<vmem>>, vector<128x8xf32>
    tpu.vector_store %arg5[%c0_8, %c0_9], %9 {strides = array<i32>} : memref<128x8xf32, #tpu.memory_space<vmem>>, vector<128x8xf32>,
    return
  }
  func.func @transform_0(%arg0: i32) -> (i32, i32) {
    %c0_i32 = arith.constant 0 : i32
    %c0_i32_0 = arith.constant 0 : i32
    return %arg0, %c0_i32 : i32, i32
  }
  func.func @transform_1(%arg0: i32) -> (i32, i32) {
    %c0_i32 = arith.constant 0 : i32
    %c0_i32_0 = arith.constant 0 : i32
    %c0_i32_1 = arith.constant 0 : i32
    return %c0_i32, %c0_i32_0 : i32, i32
  }
  func.func @transform_2(%arg0: i32) -> (i32, i32) {
    %c0_i32 = arith.constant 0 : i32
    %c0_i32_0 = arith.constant 0 : i32
    %c0_i32_1 = arith.constant 0 : i32
    return %c0_i32, %c0_i32_0 : i32, i32
  }
  func.func @transform_3(%arg0: i32) -> (i32, i32) {
    %c0_i32 = arith.constant 0 : i32
    %c0_i32_0 = arith.constant 0 : i32
    return %arg0, %c0_i32 : i32, i32
  }
  func.func @transform_4(%arg0: i32) -> (i32, i32) {
    %c0_i32 = arith.constant 0 : i32
    %c0_i32_0 = arith.constant 0 : i32
    return %arg0, %c0_i32 : i32, i32
  }
}

</mosaic_0001>

<llo_original>
// kernel: tpu_custom_call.1
$region0: #{tpu_custom_call.1}
  #allocation0 [shape = 'u32[]', space=smem, size = 0x4, offset = 0x4, fixed_abs, tag = 'smem constant byte address 0x4 - core index']
  #allocation1 [shape = 'u32[144,128]{1,0:T(1,128)}', space=vmem, size = 0x12000, scoped, tag = 'internal scratch']
  %s0 = inlined_call_operand.vmem [shape: bf16[256,36], index: 0, kind: input, shape index: {}]
  %s1 = inlined_call_operand.vmem [shape: bf16[36,8], index: 1, kind: input, shape index: {}]
  %s2 = inlined_call_operand.vmem [shape: f32[1,8], index: 2, kind: input, shape index: {}]
  %s3 = inlined_call_operand.vmem [shape: f32[256,8], index: 3, kind: input, shape index: {}]
  %s4 = inlined_call_operand.vmem [shape: f32[256,8], index: 4, kind: output, shape index: {}]
  %s5 = sld [smem:[#allocation0]]
  $region49: #{tpu_custom_call.1} parent=0
    _
  %s7 = ssub.s32 1, %s5
  %s8 = scalar_select 0, %s7, %s5
  loop: start=0, step=1, limit=4
  $region2: #{tpu_custom_call.1} parent=0 // loop_pre_header
    _
  $region3: #{tpu_custom_call.1} parent=0 // loop_header
    %s10 = sphi 0, %s14
    %p11 = scmp.ge.s32.totalorder %s10, 4
    %s20 = sphi 0, %s22
    %s23 = sphi 0, %s20
    %s24 = sphi 0, %s23
    %s40 = sphi 0, %s24
    %s44 = sphi 0, %s44
    %s46 = sphi 0, %s44
    %s47 = sphi 0, %s46
    %s61 = sphi 0, %s47
    %s65 = sphi 0, %s65
    %s67 = sphi 0, %s65
    %s68 = sphi 0, %s67
    %s82 = sphi 0, %s68
    %s88 = sphi 0, %s90
    %s91 = sphi 0, %s88
    %s92 = sphi 0, %s91
    %s108 = sphi 0, %s92
    %s114 = sphi 0, %s116
    %s117 = sphi 0, %s114
    %s118 = sphi 0, %s117
    %s134 = sphi 0, %s118
  $region4: #{tpu_custom_call.1} parent=0 // loop_header_branch
    %13 = sbr.rel (%p11) target = $region8
  $region5: #{tpu_custom_call.1} parent=0 // loop_body
    %s15 = ssub.s32 %s10, 1
    %s16 = ssub.s32 %s10, 2
    %s17 = sadd.s32 %s10, 1
    %s18 = ssub.s32 %s10, %s17
    %p19 = scmp.eq.s32.totalorder %s18, 0
    %s21 = sadd.s32 %s20, 1
    %s22 = scalar_select %p19, %s20, %s21
    %p25 = pneg %p19
    %p26 = scmp.eq.s32.totalorder %s10, 1
    %p27 = por %p25, %p26
    %p28 = scmp.ne.s32.totalorder %s20, %s23
    %p29 = scmp.eq.s32.totalorder %s10, 0
    %p30 = por %p28, %p29
    %p31 = scmp.ne.s32.totalorder %s20, %s23
    %p32 = scmp.eq.s32.totalorder %s15, 1
    %p33 = por %p31, %p32
    %p34 = scmp.ne.s32.totalorder %s23, %s24
    %p35 = scmp.eq.s32.totalorder %s15, 0
    %p36 = por %p34, %p35
    %p37 = scmp.ne.s32.totalorder %s23, %s24
    %p38 = scmp.eq.s32.totalorder %s16, 1
    %p39 = por %p37, %p38
    %p41 = scmp.ne.s32.totalorder %s24, %s40
    %p42 = scmp.eq.s32.totalorder %s16, 0
    %p43 = por %p41, %p42
    %s45 = sadd.s32 %s44, 1
    %p48 = scmp.eq.s32.totalorder %s10, 1
    %p49 = scmp.ne.s32.totalorder %s44, %s46
    %p50 = scmp.eq.s32.totalorder %s10, 0
    %p51 = por %p49, %p50
    %p52 = scmp.ne.s32.totalorder %s44, %s46
    %p53 = scmp.eq.s32.totalorder %s15, 1
    %p54 = por %p52, %p53
    %p55 = scmp.ne.s32.totalorder %s46, %s47
    %p56 = scmp.eq.s32.totalorder %s15, 0
    %p57 = por %p55, %p56
    %p58 = scmp.ne.s32.totalorder %s46, %s47
    %p59 = scmp.eq.s32.totalorder %s16, 1
    %p60 = por %p58, %p59
    %p62 = scmp.ne.s32.totalorder %s47, %s61
    %p63 = scmp.eq.s32.totalorder %s16, 0
    %p64 = por %p62, %p63
    %s66 = sadd.s32 %s65, 1
    %p69 = scmp.eq.s32.totalorder %s10, 1
    %p70 = scmp.ne.s32.totalorder %s65, %s67
    %p71 = scmp.eq.s32.totalorder %s10, 0
    %p72 = por %p70, %p71
    %p73 = scmp.ne.s32.totalorder %s65, %s67
    %p74 = scmp.eq.s32.totalorder %s15, 1
    %p75 = por %p73, %p74
    %p76 = scmp.ne.s32.totalorder %s67, %s68
    %p77 = scmp.eq.s32.totalorder %s15, 0
    %p78 = por %p76, %p77
    %p79 = scmp.ne.s32.totalorder %s67, %s68
    %p80 = scmp.eq.s32.totalorder %s16, 1
    %p81 = por %p79, %p80
    %p83 = scmp.ne.s32.totalorder %s68, %s82
    %p84 = scmp.eq.s32.totalorder %s16, 0
    %p85 = por %p83, %p84
    %s86 = ssub.s32 %s10, %s17
    %p87 = scmp.eq.s32.totalorder %s86, 0
    %s89 = sadd.s32 %s88, 1
    %s90 = scalar_select %p87, %s88, %s89
    %p93 = pneg %p87
    %p94 = scmp.eq.s32.totalorder %s10, 1
    %p95 = por %p93, %p94
    %p96 = scmp.ne.s32.totalorder %s88, %s91
    %p97 = scmp.eq.s32.totalorder %s10, 0
    %p98 = por %p96, %p97
    %p99 = scmp.ne.s32.totalorder %s88, %s91
    %p100 = scmp.eq.s32.totalorder %s15, 1
    %p101 = por %p99, %p100
    %p102 = scmp.ne.s32.totalorder %s91, %s92
    %p103 = scmp.eq.s32.totalorder %s15, 0
    %p104 = por %p102, %p103
    %p105 = scmp.ne.s32.totalorder %s91, %s92
    %p106 = scmp.eq.s32.totalorder %s16, 1
    %p107 = por %p105, %p106
    %p109 = scmp.ne.s32.totalorder %s92, %s108
    %p110 = scmp.eq.s32.totalorder %s16, 0
    %p111 = por %p109, %p110
    %s112 = ssub.s32 %s10, %s17
    %p113 = scmp.eq.s32.totalorder %s112, 0
    %s115 = sadd.s32 %s114, 1
    %s116 = scalar_select %p113, %s114, %s115
    %p119 = pneg %p113
    %p120 = scmp.eq.s32.totalorder %s10, 1
    %p121 = por %p119, %p120
    %p122 = scmp.ne.s32.totalorder %s114, %s117
    %p123 = scmp.eq.s32.totalorder %s10, 0
    %p124 = por %p122, %p123
    %p125 = scmp.ne.s32.totalorder %s114, %s117
    %p126 = scmp.eq.s32.totalorder %s15, 1
    %p127 = por %p125, %p126
    %p128 = scmp.ne.s32.totalorder %s117, %s118
    %p129 = scmp.eq.s32.totalorder %s15, 0
    %p130 = por %p128, %p129
    %p131 = scmp.ne.s32.totalorder %s117, %s118
    %p132 = scmp.eq.s32.totalorder %s16, 1
    %p133 = por %p131, %p132
    %p135 = scmp.ne.s32.totalorder %s118, %s134
    %p136 = scmp.eq.s32.totalorder %s16, 0
    %p137 = por %p135, %p136
    %p138 = scmp.le.s32.totalorder 1, %s10
    %p139 = scmp.lt.s32.totalorder %s10, 3
    %p140 = pnand %p138, %p139
    %p141 = pneg %p140
    // Predicated region
    $region9: #{tpu_custom_call.1} parent=5 // pred_check
      _
    $region10: #{tpu_custom_call.1} parent=5 // pred_check_branch
      %143 = sbr.rel (%p140) target = $region12
    $region11: #{tpu_custom_call.1} parent=5 // pred_region
      %s144 = ssub.s32 %s10, 1
      // Predicated region
      $region13: #{tpu_custom_call.1} parent=11 // pred_check
        %p145 = pneg %p57
      $region14: #{tpu_custom_call.1} parent=11 // pred_check_branch
        %147 = sbr.rel (%p145) target = $region16
      $region15: #{tpu_custom_call.1} parent=11 // pred_region
        _
      $region16: #{tpu_custom_call.1} parent=11 // pred_fallthru
        _
      // Predicated region
      $region17: #{tpu_custom_call.1} parent=11 // pred_check
        %p148 = pneg %p78
      $region18: #{tpu_custom_call.1} parent=11 // pred_check_branch
        %150 = sbr.rel (%p148) target = $region20
      $region19: #{tpu_custom_call.1} parent=11 // pred_region
        _
      $region20: #{tpu_custom_call.1} parent=11 // pred_fallthru
        _
    $region12: #{tpu_custom_call.1} parent=5 // pred_fallthru
      _
    %p151 = scmp.lt.s32.totalorder %s10, 2
    // Predicated region
    $region21: #{tpu_custom_call.1} parent=5 // pred_check
      %p152 = pneg %p151
    $region22: #{tpu_custom_call.1} parent=5 // pred_check_branch
      %154 = sbr.rel (%p152) target = $region24
    $region23: #{tpu_custom_call.1} parent=5 // pred_region
      // Predicated region
      $region25: #{tpu_custom_call.1} parent=23 // pred_check
        %p155 = pneg %p30
      $region26: #{tpu_custom_call.1} parent=23 // pred_check_branch
        %157 = sbr.rel (%p155) target = $region28
      $region27: #{tpu_custom_call.1} parent=23 // pred_region
        %s158 = smul.u32 16, %s10
        %p159 = scmp.lt.s32.totalorder %s158, 31
        %s160 = scalar_select %p159, %s158, 31
        %s161 = smul.addr %s160, 4
        %s162 = scalar_lea.vmem %s0, %s161
        %s163 = smul.u32 16, %s10
      $region28: #{tpu_custom_call.1} parent=23 // pred_fallthru
        _
      // Predicated region
      $region29: #{tpu_custom_call.1} parent=23 // pred_check
        %p164 = pneg %p98
      $region30: #{tpu_custom_call.1} parent=23 // pred_check_branch
        %166 = sbr.rel (%p164) target = $region32
      $region31: #{tpu_custom_call.1} parent=23 // pred_region
        %s167 = smul.u32 16, %s10
        %p168 = scmp.lt.s32.totalorder %s167, 31
        %s169 = scalar_select %p168, %s167, 31
        %s170 = smul.addr %s169, 8
        %s171 = scalar_lea.vmem %s3, %s170
        %s172 = smul.u32 16, %s10
      $region32: #{tpu_custom_call.1} parent=23 // pred_fallthru
        _
    $region24: #{tpu_custom_call.1} parent=5 // pred_fallthru
      _
    %p173 = scmp.le.s32.totalorder 1, %s10
    %p174 = scmp.lt.s32.totalorder %s10, 3
    %p175 = pnand %p173, %p174
    %p176 = pneg %p175
    // Predicated region
    $region33: #{tpu_custom_call.1} parent=5 // pred_check
      _
    $region34: #{tpu_custom_call.1} parent=5 // pred_check_branch
      %178 = sbr.rel (%p175) target = $region36
    $region35: #{tpu_custom_call.1} parent=5 // pred_region
      %s179 = ssub.s32 %s10, 1
      %s180 = smul.u32 16, %s15
      %p181 = scmp.lt.s32.totalorder %s180, 31
      %s182 = scalar_select %p181, %s180, 31
      %s183 = smul.addr %s182, 4
      %s184 = scalar_lea.vmem %s0, %s183
      %p185 = pneg %p36
      %p186 = pneg %p33
      %p187 = pneg %p57
      %p188 = pneg %p54
      %p189 = pneg %p78
      %p190 = pneg %p75
      %s191 = smul.u32 16, %s15
      %p192 = scmp.lt.s32.totalorder %s191, 31
      %s193 = scalar_select %p192, %s191, 31
      %s194 = smul.addr %s193, 8
      %s195 = scalar_lea.vmem %s3, %s194
      %p196 = pneg %p104
      %p197 = pneg %p101
      %p198 = pneg %p130
      %p199 = pneg %p127
      %s200 = smul.u32 16, %s15
      %p201 = scmp.lt.s32.totalorder %s200, 31
      %s202 = scalar_select %p201, %s200, 31
      %s203 = smul.addr %s202, 8
      %s204 = scalar_lea.vmem %s4, %s203
      %s205 = smul.u32 16, %s15
      %p206 = scmp.lt.s32.totalorder %s205, 31
      %s207 = scalar_select %p206, %s205, 31
      %s208 = smul.addr %s207, 4
      %s209 = scalar_lea.vmem %s0, %s208
      %s210 = smul.u32 16, %s15
      %s211 = smul.u32 16, %s15
      %p212 = scmp.lt.s32.totalorder %s211, 31
      %s213 = scalar_select %p212, %s211, 31
      %s214 = smul.addr %s213, 8
      %s215 = scalar_lea.vmem %s3, %s214
      %s216 = smul.u32 16, %s15
      %s217 = smul.u32 16, %s15
      %p218 = scmp.lt.s32.totalorder %s217, 31
      %s219 = scalar_select %p218, %s217, 31
      %s220 = smul.addr %s219, 8
      %s221 = scalar_lea.vmem %s4, %s220
      %s222 = smul.u32 16, %s15
      %v224 = vld [vmem:[%s209] sm:$0xf]
      %v225 = vld [vmem:[%s209 + $0x4] sm:$0xf]
      %v226 = vld [vmem:[%s209 + $0x8] sm:$0xf]
      %v227 = vld [vmem:[%s209 + $0xc] sm:$0xf]
      %v228 = vld [vmem:[%s209 + $0x10] sm:$0xf]
      %v229 = vld [vmem:[%s209 + $0x14] sm:$0xf]
      %v230 = vld [vmem:[%s209 + $0x18] sm:$0xf]
      %v231 = vld [vmem:[%s209 + $0x1c] sm:$0xf]
      %v232 = vld [vmem:[%s209 + $0x20] sm:$0xf]
      %v233 = vld [vmem:[%s209 + $0x24] sm:$0xf]
      %v234 = vld [vmem:[%s209 + $0x28] sm:$0xf]
      %v235 = vld [vmem:[%s209 + $0x2c] sm:$0xf]
      %v236 = vld [vmem:[%s209 + $0x30] sm:$0xf]
      %v237 = vld [vmem:[%s209 + $0x34] sm:$0xf]
      %v238 = vld [vmem:[%s209 + $0x38] sm:$0xf]
      %v239 = vld [vmem:[%s209 + $0x3c] sm:$0xf]
      %v240 = vmax.bf16 %v224, 0
      %v241 = vmax.bf16 %v225, 0
      %v242 = vmax.bf16 %v226, 0
      %v243 = vmax.bf16 %v227, 0
      %v244 = vmax.bf16 %v228, 0
      %v245 = vmax.bf16 %v229, 0
      %v246 = vmax.bf16 %v230, 0
      %v247 = vmax.bf16 %v231, 0
      %v248 = vmax.bf16 %v232, 0
      %v249 = vmax.bf16 %v233, 0
      %v250 = vmax.bf16 %v234, 0
      %v251 = vmax.bf16 %v235, 0
      %v252 = vmax.bf16 %v236, 0
      %v253 = vmax.bf16 %v237, 0
      %v254 = vmax.bf16 %v238, 0
      %v255 = vmax.bf16 %v239, 0
      %v256 = vld [vmem:[%s1] sm:$0xf]
      %v257 = vld [vmem:[%s1 + $0x4] sm:$0xf]
      %v258 = vld [vmem:[%s1 + $0x8] sm:$0xf]
      %v259 = vld [vmem:[%s1 + $0xc] sm:$0xf]
      %v260 = vld [vmem:[%s1 + $0x10] sm:$0x3]
      %v261 = vld [vmem:[%s2] sm:$0x1]
      %v263 = vlaneseq
      %v264 = vshrl.u32 %v263, 7
      %v265 = vsub.s32 0, %v264
      %v266 = vrot.slane %v261, %v265
      %v284 = vunpack.c.l.b16 %v240
      %v285 = vunpack.c.l.b16 %v241
      %v286 = vunpack.c.l.b16 %v242
      %v287 = vunpack.c.l.b16 %v243
      %v288 = vunpack.c.l.b16 %v244
      %v289 = vunpack.c.l.b16 %v245
      %v290 = vunpack.c.l.b16 %v246
      %v291 = vunpack.c.l.b16 %v247
      %v292 = vunpack.c.l.b16 %v248
      %v293 = vunpack.c.l.b16 %v249
      %v294 = vunpack.c.l.b16 %v250
      %v295 = vunpack.c.l.b16 %v251
      %v296 = vunpack.c.l.b16 %v252
      %v297 = vunpack.c.l.b16 %v253
      %v298 = vunpack.c.l.b16 %v254
      %v299 = vunpack.c.l.b16 %v255
      %v300 = vpack.c.b16 %v285, %v284
      %v301 = vpack.c.b16 %v287, %v286
      %v302 = vpack.c.b16 %v289, %v288
      %v303 = vpack.c.b16 %v291, %v290
      %v304 = vpack.c.b16 %v293, %v292
      %v305 = vpack.c.b16 %v295, %v294
      %v306 = vpack.c.b16 %v297, %v296
      %v307 = vpack.c.b16 %v299, %v298
      %v313 = vunpack.c.l.b16 %v256
      %v314 = vunpack.c.l.b16 %v257
      %v315 = vunpack.c.l.b16 %v258
      %v316 = vunpack.c.l.b16 %v259
      %v317 = vunpack.c.l.b16 %v260
      %v318 = vpack.c.b16 %v314, %v313
      %v319 = vpack.c.b16 %v316, %v315
      %v320 = vpack.c.b16 %v317, %v317
      %vm323 = vcmask 293888
      %v325 = vsel %vm323, %v300, 0
      %v328 = vsel %vm323, %v301, 0
      %v331 = vsel %vm323, %v302, 0
      %v334 = vsel %vm323, %v303, 0
      %v337 = vsel %vm323, %v304, 0
      %v340 = vsel %vm323, %v305, 0
      %v343 = vsel %vm323, %v306, 0
      %v346 = vsel %vm323, %v307, 0
      %vm348 = vcmask 1041408
      %v350 = vsel %vm348, %v320, 0
      %352 = vmatprep.subr.bf16.mxu0 0
      %353 = vmatpush1.bf16.msra.mxu0 0
      %354 = vmatprep.subr.bf16.mxu0 0
      %355 = vmatpush1.bf16.msra.mxu0 0
      %356 = vmatprep.subr.bf16.mxu0 0
      %357 = vmatpush1.bf16.msra.mxu0 0
      %358 = vmatprep.subr.bf16.mxu0 0
      %359 = vmatpush1.bf16.msra.mxu0 0
      %360 = vmatprep.subr.bf16.mxu0 0
      %361 = vmatpush1.bf16.msra.mxu0 0
      %362 = vmatprep.subr.bf16.mxu0 0
      %363 = vmatpush1.bf16.msra.mxu0 %v350
      %364 = vmatprep.subr.bf16.mxu0 0
      %365 = vmatpush1.bf16.msra.mxu0 %v319
      %366 = vmatprep.subr.bf16.mxu0 0
      %367 = vmatpush1.bf16.msra.mxu0 %v318
      %368 = vmatprep.subr.bf16.mxu0 0
      %369 = vmatpush2.bf16.msra.mxu0 0
      %370 = vmatprep.subr.bf16.mxu0 0
      %371 = vmatpush2.bf16.msra.mxu0 0
      %372 = vmatprep.subr.bf16.mxu0 0
      %373 = vmatpush2.bf16.msra.mxu0 0
      %374 = vmatprep.subr.bf16.mxu0 0
      %375 = vmatpush2.bf16.msra.mxu0 0
      %376 = vmatprep.subr.bf16.mxu0 0
      %377 = vmatpush2.bf16.msra.mxu0 0
      %378 = vmatprep.subr.bf16.mxu0 0
      %379 = vmatpush2.bf16.msra.mxu0 0
      %380 = vmatprep.subr.bf16.mxu0 0
      %381 = vmatpush2.bf16.msra.mxu0 0
      %382 = vmatprep.subr.bf16.mxu0 0
      %383 = vmatpush2.bf16.msra.mxu0 0
      %384 = vmatprep.mubr.bf16.mxu0 0
      %385 = vmatmul.mubr.bf16.gmra.mxu0 %v325
      %v386 = vpop.f32.mrf.mxu0
      %v387 = vadd.f32 %v266, %v386
      %v388 = vpop.f32.mrf.mxu0
      %v389 = vpop.f32.mrf.mxu0
      %v390 = vadd.f32 %v266, %v389
      %v391 = vpop.f32.mrf.mxu0
      %392 = vmatprep.mubr.bf16.mxu0 0
      %393 = vmatmul.mubr.bf16.gmra.mxu0 %v328
      %v394 = vpop.f32.mrf.mxu0
      %v395 = vadd.f32 %v266, %v394
      %v396 = vpop.f32.mrf.mxu0
      %v397 = vpop.f32.mrf.mxu0
      %v398 = vadd.f32 %v266, %v397
      %v399 = vpop.f32.mrf.mxu0
      %400 = vmatprep.mubr.bf16.mxu0 0
      %401 = vmatmul.mubr.bf16.gmra.mxu0 %v331
      %v402 = vpop.f32.mrf.mxu0
      %v403 = vadd.f32 %v266, %v402
      %v404 = vpop.f32.mrf.mxu0
      %v405 = vpop.f32.mrf.mxu0
      %v406 = vadd.f32 %v266, %v405
      %v407 = vpop.f32.mrf.mxu0
      %408 = vmatprep.mubr.bf16.mxu0 0
      %409 = vmatmul.mubr.bf16.gmra.mxu0 %v334
      %v410 = vpop.f32.mrf.mxu0
      %v411 = vadd.f32 %v266, %v410
      %v412 = vpop.f32.mrf.mxu0
      %v413 = vpop.f32.mrf.mxu0
      %v414 = vadd.f32 %v266, %v413
      %v415 = vpop.f32.mrf.mxu0
      %416 = vmatprep.mubr.bf16.mxu0 0
      %417 = vmatmul.mubr.bf16.gmra.mxu0 %v337
      %v418 = vpop.f32.mrf.mxu0
      %v419 = vadd.f32 %v266, %v418
      %v420 = vpop.f32.mrf.mxu0
      %v421 = vpop.f32.mrf.mxu0
      %v422 = vadd.f32 %v266, %v421
      %v423 = vpop.f32.mrf.mxu0
      %424 = vmatprep.mubr.bf16.mxu0 0
      %425 = vmatmul.mubr.bf16.gmra.mxu0 %v340
      %v426 = vpop.f32.mrf.mxu0
      %v427 = vadd.f32 %v266, %v426
      %v428 = vpop.f32.mrf.mxu0
      %v429 = vpop.f32.mrf.mxu0
      %v430 = vadd.f32 %v266, %v429
      %v431 = vpop.f32.mrf.mxu0
      %432 = vmatprep.mubr.bf16.mxu0 0
      %433 = vmatmul.mubr.bf16.gmra.mxu0 %v343
      %v434 = vpop.f32.mrf.mxu0
      %v435 = vadd.f32 %v266, %v434
      %v436 = vpop.f32.mrf.mxu0
      %v437 = vpop.f32.mrf.mxu0
      %v438 = vadd.f32 %v266, %v437
      %v439 = vpop.f32.mrf.mxu0
      %440 = vmatprep.mubr.bf16.mxu0 0
      %441 = vmatmul.mubr.bf16.gmra.mxu0 %v346
      %v442 = vpop.f32.mrf.mxu0
      %v443 = vadd.f32 %v266, %v442
      %v444 = vpop.f32.mrf.mxu0
      %v445 = vpop.f32.mrf.mxu0
      %v446 = vadd.f32 %v266, %v445
      %v447 = vpop.f32.mrf.mxu0
      %448 = vdwg.mxu0
      %v449 = vld [vmem:[%s215] sm:$0xff]
      %v450 = vld [vmem:[%s215 + $0x8] sm:$0xff]
      %v451 = vld [vmem:[%s215 + $0x10] sm:$0xff]
      %v452 = vld [vmem:[%s215 + $0x18] sm:$0xff]
      %v453 = vld [vmem:[%s215 + $0x20] sm:$0xff]
      %v454 = vld [vmem:[%s215 + $0x28] sm:$0xff]
      %v455 = vld [vmem:[%s215 + $0x30] sm:$0xff]
      %v456 = vld [vmem:[%s215 + $0x38] sm:$0xff]
      %v457 = vld [vmem:[%s215 + $0x40] sm:$0xff]
      %v458 = vld [vmem:[%s215 + $0x48] sm:$0xff]
      %v459 = vld [vmem:[%s215 + $0x50] sm:$0xff]
      %v460 = vld [vmem:[%s215 + $0x58] sm:$0xff]
      %v461 = vld [vmem:[%s215 + $0x60] sm:$0xff]
      %v462 = vld [vmem:[%s215 + $0x68] sm:$0xff]
      %v463 = vld [vmem:[%s215 + $0x70] sm:$0xff]
      %v464 = vld [vmem:[%s215 + $0x78] sm:$0xff]
      %v465 = vadd.f32 %v387, %v449
      %v466 = vadd.f32 %v390, %v450
      %v467 = vadd.f32 %v395, %v451
      %v468 = vadd.f32 %v398, %v452
      %v469 = vadd.f32 %v403, %v453
      %v470 = vadd.f32 %v406, %v454
      %v471 = vadd.f32 %v411, %v455
      %v472 = vadd.f32 %v414, %v456
      %v473 = vadd.f32 %v419, %v457
      %v474 = vadd.f32 %v422, %v458
      %v475 = vadd.f32 %v427, %v459
      %v476 = vadd.f32 %v430, %v460
      %v477 = vadd.f32 %v435, %v461
      %v478 = vadd.f32 %v438, %v462
      %v479 = vadd.f32 %v443, %v463
      %v480 = vadd.f32 %v446, %v464
      %vm481 = vcmask 64512
      %482 = vst.msk [vmem:[%s221] sm:$0xff] %vm481, %v465
      %483 = vst.msk [vmem:[%s221 + $0x8] sm:$0xff] %vm481, %v466
      %484 = vst.msk [vmem:[%s221 + $0x10] sm:$0xff] %vm481, %v467
      %485 = vst.msk [vmem:[%s221 + $0x18] sm:$0xff] %vm481, %v468
      %486 = vst.msk [vmem:[%s221 + $0x20] sm:$0xff] %vm481, %v469
      %487 = vst.msk [vmem:[%s221 + $0x28] sm:$0xff] %vm481, %v470
      %488 = vst.msk [vmem:[%s221 + $0x30] sm:$0xff] %vm481, %v471
      %489 = vst.msk [vmem:[%s221 + $0x38] sm:$0xff] %vm481, %v472
      %490 = vst.msk [vmem:[%s221 + $0x40] sm:$0xff] %vm481, %v473
      %491 = vst.msk [vmem:[%s221 + $0x48] sm:$0xff] %vm481, %v474
      %492 = vst.msk [vmem:[%s221 + $0x50] sm:$0xff] %vm481, %v475
      %493 = vst.msk [vmem:[%s221 + $0x58] sm:$0xff] %vm481, %v476
      %494 = vst.msk [vmem:[%s221 + $0x60] sm:$0xff] %vm481, %v477
      %495 = vst.msk [vmem:[%s221 + $0x68] sm:$0xff] %vm481, %v478
      %496 = vst.msk [vmem:[%s221 + $0x70] sm:$0xff] %vm481, %v479
      %497 = vst.msk [vmem:[%s221 + $0x78] sm:$0xff] %vm481, %v480
      %s498 = smul.u32 16, %s15
      %p499 = scmp.lt.s32.totalorder %s498, 31
      %s500 = scalar_select %p499, %s498, 31
      %s501 = smul.addr %s500, 8
      %s502 = scalar_lea.vmem %s4, %s501
      // Predicated region
      $region37: #{tpu_custom_call.1} parent=35 // pred_check
        %p503 = pneg %p127
      $region38: #{tpu_custom_call.1} parent=35 // pred_check_branch
        %505 = sbr.rel (%p503) target = $region40
      $region39: #{tpu_custom_call.1} parent=35 // pred_region
        %s506 = smul.u32 16, %s15
      $region40: #{tpu_custom_call.1} parent=35 // pred_fallthru
        _
    $region36: #{tpu_custom_call.1} parent=5 // pred_fallthru
      _
    %p507 = scmp.le.s32.totalorder 2, %s10
    // Predicated region
    $region41: #{tpu_custom_call.1} parent=5 // pred_check
      %p508 = pneg %p507
    $region42: #{tpu_custom_call.1} parent=5 // pred_check_branch
      %510 = sbr.rel (%p508) target = $region44
    $region43: #{tpu_custom_call.1} parent=5 // pred_region
      %s511 = ssub.s32 %s10, 2
      // Predicated region
      $region45: #{tpu_custom_call.1} parent=43 // pred_check
        %p512 = pneg %p133
      $region46: #{tpu_custom_call.1} parent=43 // pred_check_branch
        %514 = sbr.rel (%p512) target = $region48
      $region47: #{tpu_custom_call.1} parent=43 // pred_region
        %s515 = smul.u32 16, %s16
        %p516 = scmp.lt.s32.totalorder %s515, 31
        %s517 = scalar_select %p516, %s515, 31
        %s518 = smul.addr %s517, 8
        %s519 = scalar_lea.vmem %s4, %s518
      $region48: #{tpu_custom_call.1} parent=43 // pred_fallthru
        _
    $region44: #{tpu_custom_call.1} parent=5 // pred_fallthru
      _
  $region6: #{tpu_custom_call.1} parent=0 // loop_footer
    %s14 = sadd.s32 1, %s10
  $region7: #{tpu_custom_call.1} parent=0 // loop_footer_branch
    %9 = sbr.rel target = $region3
  $region8: #{tpu_custom_call.1} parent=0 // loop_exit
    _

</llo_original>
